<compile_context>
chip_gen: v7x
topology: tpu7x:2x2x1
jax: 0.10.0
libtpu: 0.0.40
codegen_flags: <defaults>
</compile_context>

<pallas_src>
import math
import functools

import jax
import jax.numpy as jnp
from jax.experimental import pallas as pl
from jax.experimental.pallas import tpu as pltpu


# ----------------------------------------------------------------------------
# Kernels. Tiles: x/out -> (ts, bb, D), pe -> (ts, 1, D) (broadcast over batch)
# ----------------------------------------------------------------------------
def _pe_add_kernel(x_ref, pe_ref, o_ref):
    o_ref[...] = (x_ref[...] + pe_ref[...]).astype(o_ref.dtype)


def _pe_add_dropout_kernel(seed_ref, x_ref, pe_ref, o_ref, *, keep_prob: float):
    # seed_ref: SMEM scalar-prefetch array, shape (1,)
    y = x_ref[...] + pe_ref[...]

    # Independent, order-invariant random bits per (seq-tile, batch-tile) grid
    # step so both grid axes stay "parallel" (megacore-friendly).
    pltpu.prng_seed(seed_ref[0], pl.program_id(0), pl.program_id(1))
    bits = pltpu.prng_random_bits(y.shape)
    if bits.dtype != jnp.dtype(jnp.uint32):   # usually already uint32 -> no-op
        bits = pltpu.bitcast(bits, jnp.uint32)

    # keep element iff uniform < keep_prob (uniform ~ u32 / 2^32); clamp so a
    # keep_prob ~ 1.0 threshold does not wrap to 0.
    thresh_int = min(int(round(keep_prob * float(2 ** 32))), 2 ** 32 - 1)
    keep = bits < jnp.uint32(thresh_int)

    # Scale in f32 (avoids bf16 rounding of 1/keep_prob), cast once on store.
    y32 = y.astype(jnp.float32)
    scaled = y32 * jnp.float32(1.0 / keep_prob)
    o_ref[...] = jnp.where(keep, scaled, jnp.zeros_like(scaled)).astype(o_ref.dtype)


# ----------------------------------------------------------------------------
# Helpers
# ----------------------------------------------------------------------------
def _vmem_capacity_bytes() -> int:
    """Per-generation VMEM capacity; conservative (v7x) fallback."""
    try:
        if jax.default_backend() == "tpu":
            return int(pltpu.get_tpu_info().vmem_capacity_bytes)
    except Exception:
        pass
    return 64 * 1024 * 1024


def _pick_tiles(S: int, B: int, D: int, itemsize: int, vmem_limit: int):
    """Pick (seq_tile ts, batch_block bb) for the (ts, bb, D) x/out block.

    x and out are each double-buffered (4 tile-sized buffers) plus the smaller
    double-buffered pe tile -> budget ~= 80% of vmem_limit split 6 ways.
    """
    budget = max(D * itemsize, (vmem_limit * 4 // 5) // 6)
    plane = D * itemsize                      # bytes of one (1, 1, D) row

    # Prefer the whole batch in the block: a (ts, B, D) tile of a (S, B, D)
    # row-major array is fully contiguous in HBM (best DMA bursts).
    bb = B
    if B >= 8 and B % 8 == 0 and B * plane * 8 > budget:
        # Whole batch would force ts < 8 rows: split batch into multiple-of-8
        # chunks (keeps sublanes packed and the block legal).
        m8 = [d for d in range(8, B, 8) if B % d == 0 and d * plane * 8 <= budget]
        if m8:
            bb = max(m8)

    ts = max(1, min(S, budget // max(1, bb * plane)))
    if ts >= 8:
        ts -= ts % 8                          # multiple-of-8 rows where possible
    return ts, bb


def make_positional_encoding(d_model: int, max_len: int = 5000):
    """Builds the pe buffer exactly like the PyTorch __init__ (plain JAX glue)."""
    position = jnp.arange(max_len, dtype=jnp.float32)[:, None]            # (L, 1)
    div_term = jnp.exp(
        jnp.arange(0, d_model, 2, dtype=jnp.float32) * (-math.log(10000.0) / d_model)
    )                                                                      # (D/2,)
    pe = jnp.zeros((max_len, 1, d_model), dtype=jnp.float32)
    pe = pe.at[:, 0, 0::2].set(jnp.sin(position * div_term))
    pe = pe.at[:, 0, 1::2].set(jnp.cos(position * div_term))
    return pe


# ----------------------------------------------------------------------------
# Module-equivalent forward
# ----------------------------------------------------------------------------
def positional_encoding_forward(x, pe, *, dropout_p: float = 0.1,
                                training: bool = False, seed: int = 0,
                                donate_x: bool = False):
    """x: (S, B, D); pe: (max_len, 1, D). Returns dropout(x + pe[:S])."""
    S, B, D = x.shape
    assert pe.ndim == 3 and pe.shape[1] == 1 and pe.shape[2] == D
    assert pe.shape[0] >= S

    # Slice first, cast second: only S rows of the pe table are converted
    # (cheap even when max_len >> S). Callers may also pre-cast & pre-slice.
    pe_s = pe[:S]
    if pe_s.dtype != x.dtype:
        pe_s = pe_s.astype(x.dtype)

    vmem_cap = _vmem_capacity_bytes()
    vmem_limit = min(int(vmem_cap * 3 // 4), 112 * 1024 * 1024)
    ts, bb = _pick_tiles(S, B, D, x.dtype.itemsize, vmem_limit)

    # Grid: (seq tiles, batch tiles). pe's index_map ignores the batch axis so
    # its tile stays resident across batch steps. cdiv handles ragged S.
    grid = (pl.cdiv(S, ts), B // bb)

    x_spec = pl.BlockSpec((ts, bb, D), lambda i, b, *_: (i, b, 0))
    pe_spec = pl.BlockSpec((ts, 1, D), lambda i, b, *_: (i, 0, 0))
    o_spec = pl.BlockSpec((ts, bb, D), lambda i, b, *_: (i, b, 0))
    out_shape = jax.ShapeDtypeStruct((S, B, D), x.dtype)

    compiler_params = pltpu.CompilerParams(
        dimension_semantics=("parallel", "parallel"),
        vmem_limit_bytes=vmem_limit,
    )

    if (not training) or dropout_p == 0.0:
        return pl.pallas_call(
            _pe_add_kernel,
            out_shape=out_shape,
            grid_spec=pltpu.PrefetchScalarGridSpec(
                num_scalar_prefetch=0,
                grid=grid,
                in_specs=[x_spec, pe_spec],
                out_specs=o_spec,
            ),
            compiler_params=compiler_params,
            input_output_aliases=({0: 0} if donate_x else {}),
        )(x, pe_s)

    if dropout_p >= 1.0:
        # PyTorch dropout with p=1 zeroes everything.
        return jnp.zeros((S, B, D), dtype=x.dtype)

    keep_prob = 1.0 - float(dropout_p)
    kernel = functools.partial(_pe_add_dropout_kernel, keep_prob=keep_prob)
    seed_arr = jnp.asarray([seed], dtype=jnp.int32)
    return pl.pallas_call(
        kernel,
        out_shape=out_shape,
        grid_spec=pltpu.PrefetchScalarGridSpec(
            num_scalar_prefetch=1,
            grid=grid,
            in_specs=[x_spec, pe_spec],
            out_specs=o_spec,
        ),
        compiler_params=compiler_params,
        input_output_aliases=({1: 0} if donate_x else {}),
    )(seed_arr, x, pe_s)


# ----------------------------------------------------------------------------
# Demo / self-check
# ----------------------------------------------------------------------------
if __name__ == "__main__":
    d_model = 128     # lane-dense output (D % 128 == 0) -> unmasked vector stores
    max_len = 64
    seq_len = 16
    batch = 2

    pe = make_positional_encoding(d_model, max_len)

    key = jax.random.PRNGKey(0)
    x = jax.random.normal(key, (seq_len, batch, d_model), dtype=jnp.float32)

    # eval-mode forward (deterministic): dropout is identity
    out = positional_encoding_forward(x, pe, dropout_p=0.1, training=False)
    out = jax.block_until_ready(out)

    ref = x + pe[:seq_len]
    assert out.shape == (seq_len, batch, d_model)
    assert jnp.allclose(out, ref, atol=1e-6, rtol=1e-6), "mismatch vs reference"

    # Train-mode dropout uses the TPU hardware PRNG (no CPU/interpret lowering
    # for prng_seed), so only exercise it on a real TPU backend.
    if jax.default_backend() == "tpu":
        keep_prob = 0.9
        out_train = positional_encoding_forward(
            x, pe, dropout_p=1.0 - keep_prob, training=True, seed=123)
        out_train = jax.block_until_ready(out_train)
        assert out_train.shape == (seq_len, batch, d_model)
        scaled = ref / keep_prob
        ok = jnp.isclose(out_train, 0.0, atol=1e-6) | jnp.isclose(
            out_train, scaled, atol=1e-5, rtol=1e-5)
        assert bool(jnp.all(ok)), "dropout output not in {0, (x+pe)/keep_prob}"

    print("KERNEL_OK")
</pallas_src>

<mosaic_0001>
module attributes {stable_mosaic.version = 11 : i64} {
  func.func @_pe_add_kernel(%arg0: i32, %arg1: i32, %arg2: memref<16x2x128xf32, #tpu.memory_space<vmem>>, %arg3: memref<16x1x128xf32, #tpu.memory_space<vmem>>, %arg4: memref<16x2x128xf32, #tpu.memory_space<vmem>>) attributes {dimension_semantics = [#tpu.dimension_semantics<parallel>, #tpu.dimension_semantics<parallel>], iteration_bounds = array<i64: 1, 1>, scalar_prefetch = 0 : i64, scratch_operands = 0 : i64, tpu.core_type = #tpu.core_type<tc>, window_params = [{transform_indices = @transform_0, window_bounds = array<i64: 16, 2, 128>}, {transform_indices = @transform_1, window_bounds = array<i64: 16, 1, 128>}, {transform_indices = @transform_2, window_bounds = array<i64: 16, 2, 128>}]} {
    %c0 = arith.constant 0 : index
    %c0_0 = arith.constant 0 : index
    %c0_1 = arith.constant 0 : index
    %0 = vector.load %arg2[%c0, %c0_0, %c0_1] : memref<16x2x128xf32, #tpu.memory_space<vmem>>, vector<16x2x128xf32>
    %c0_2 = arith.constant 0 : index
    %c0_3 = arith.constant 0 : index
    %c0_4 = arith.constant 0 : index
    %1 = vector.load %arg3[%c0_2, %c0_3, %c0_4] : memref<16x1x128xf32, #tpu.memory_space<vmem>>, vector<16x1x128xf32>
    %2 = vector.broadcast %1 : vector<16x1x128xf32> to vector<16x2x128xf32>
    %3 = arith.addf %0, %2 : vector<16x2x128xf32>
    %c0_5 = arith.constant 0 : index
    %c0_6 = arith.constant 0 : index
    %c0_7 = arith.constant 0 : index
    %4 = vector.load %arg4[%c0_5, %c0_6, %c0_7] : memref<16x2x128xf32, #tpu.memory_space<vmem>>, vector<16x2x128xf32>
    tpu.vector_store %arg4[%c0_5, %c0_6, %c0_7], %3 {strides = array<i32>} : memref<16x2x128xf32, #tpu.memory_space<vmem>>, vector<16x2x128xf32>,
    return
  }
  func.func @transform_0(%arg0: i32, %arg1: i32) -> (i32, i32, i32) {
    %c0_i32 = arith.constant 0 : i32
    %c0_i32_0 = arith.constant 0 : i32
    return %arg0, %arg1, %c0_i32 : i32, i32, i32
  }
  func.func @transform_1(%arg0: i32, %arg1: i32) -> (i32, i32, i32) {
    %c0_i32 = arith.constant 0 : i32
    %c0_i32_0 = arith.constant 0 : i32
    %c0_i32_1 = arith.constant 0 : i32
    return %arg0, %c0_i32, %c0_i32_0 : i32, i32, i32
  }
  func.func @transform_2(%arg0: i32, %arg1: i32) -> (i32, i32, i32) {
    %c0_i32 = arith.constant 0 : i32
    %c0_i32_0 = arith.constant 0 : i32
    return %arg0, %arg1, %c0_i32 : i32, i32, i32
  }
}

</mosaic_0001>

<llo_original>
// kernel: tpu_custom_call.1
$region0: #{tpu_custom_call.1}
  #allocation0 [shape = 'u32[]', space=smem, size = 0x4, offset = 0x4, fixed_abs, tag = 'smem constant byte address 0x4 - core index']
  #allocation1 [shape = 'u32[144,128]{1,0:T(1,128)}', space=vmem, size = 0x12000, scoped, tag = 'internal scratch']
  %s0 = inlined_call_operand.hbm [shape: f32[16,2,128], index: 0, kind: input, shape index: {}]
  %s1 = inlined_call_operand.hbm [shape: f32[16,1,128], index: 1, kind: input, shape index: {}]
  %s2 = inlined_call_operand.hbm [shape: f32[16,2,128], index: 2, kind: output, shape index: {}]
  %s3 = sld [smem:[#allocation0]]
  $region26: #{tpu_custom_call.1} parent=0
    _
  %s5 = ssub.s32 1, %s3
  %s6 = scalar_select 0, %s5, %s3
  $region1: #{tpu_custom_call.1} parent=0
    #allocation2 [shape = 'u8[16384]{0}', space=vmem, size = 0x4000, scoped, tag = 'input window, operand 0, single buffered']
    #allocation3 [shape = 's32[1]{0}', space=sflag, size = 0x4, scoped, tag = 'scoped memory for tpu_custom_call.1']
    #allocation4 [shape = 's32[1]{0}', space=sflag, size = 0x4, scoped, tag = 'scoped memory for tpu_custom_call.1']
    #allocation5 [shape = 'u8[8192]{0}', space=vmem, size = 0x2000, scoped, tag = 'input window, operand 1, single buffered']
    #allocation6 [shape = 's32[1]{0}', space=sflag, size = 0x4, scoped, tag = 'scoped memory for tpu_custom_call.1']
    #allocation7 [shape = 'u8[16384]{0}', space=vmem, size = 0x4000, scoped, tag = 'output window, operand 0, single buffered']
    %7 = vsyncpa [#allocation3], 0
    %8 = vsyncpa [#allocation6], 0
    %9 = vsyncpa [#allocation4], 0
    // Predicated region
    $region2: #{tpu_custom_call.1} parent=1 // pred_check
      _
    $region3: #{tpu_custom_call.1} parent=1 // pred_check_branch
      %11 = sbr.rel (0) target = $region5
    $region4: #{tpu_custom_call.1} parent=1 // pred_region
      %s13 = ssub.s32 512, 512
      %14 = vsyncadd [#allocation3], %s13
      %s15 = sshll.u32 [#allocation2], 4
      %s16 = int_to_ptr.vmem [resolvable:$true] %s15
      %21 = dma.hbm_to_vmem [thread:$0]  %s0, 512, %s16, [#allocation3], 32, 32, 2
    $region5: #{tpu_custom_call.1} parent=1 // pred_fallthru
      _
    // Predicated region
    $region6: #{tpu_custom_call.1} parent=1 // pred_check
      _
    $region7: #{tpu_custom_call.1} parent=1 // pred_check_branch
      %23 = sbr.rel (0) target = $region9
    $region8: #{tpu_custom_call.1} parent=1 // pred_region
      %s25 = ssub.s32 256, 256
      %26 = vsyncadd [#allocation6], %s25
      %s27 = sshll.u32 [#allocation5], 4
      %s28 = int_to_ptr.vmem [resolvable:$true] %s27
      %33 = dma.hbm_to_vmem [thread:$0]  %s1, 256, %s28, [#allocation6], 16, 16, 1
    $region9: #{tpu_custom_call.1} parent=1 // pred_fallthru
      _
    // Predicated region
    $region10: #{tpu_custom_call.1} parent=1 // pred_check
      _
    $region11: #{tpu_custom_call.1} parent=1 // pred_check_branch
      %35 = sbr.rel (0) target = $region13
    $region12: #{tpu_custom_call.1} parent=1 // pred_region
      %36 = dma.done [#allocation3], 512
    $region13: #{tpu_custom_call.1} parent=1 // pred_fallthru
      _
    // Predicated region
    $region14: #{tpu_custom_call.1} parent=1 // pred_check
      _
    $region15: #{tpu_custom_call.1} parent=1 // pred_check_branch
      %38 = sbr.rel (0) target = $region17
    $region16: #{tpu_custom_call.1} parent=1 // pred_region
      %39 = dma.done [#allocation6], 256
    $region17: #{tpu_custom_call.1} parent=1 // pred_fallthru
      _
    %v40 = vld [vmem:[#allocation2] sm:$0x3]
    %v41 = vld [vmem:[#allocation2 + $0x2] sm:$0x3]
    %v42 = vld [vmem:[#allocation2 + $0x4] sm:$0x3]
    %v43 = vld [vmem:[#allocation2 + $0x6] sm:$0x3]
    %v44 = vld [vmem:[#allocation2 + $0x8] sm:$0x3]
    %v45 = vld [vmem:[#allocation2 + $0xa] sm:$0x3]
    %v46 = vld [vmem:[#allocation2 + $0xc] sm:$0x3]
    %v47 = vld [vmem:[#allocation2 + $0xe] sm:$0x3]
    %v48 = vld [vmem:[#allocation2 + $0x10] sm:$0x3]
    %v49 = vld [vmem:[#allocation2 + $0x12] sm:$0x3]
    %v50 = vld [vmem:[#allocation2 + $0x14] sm:$0x3]
    %v51 = vld [vmem:[#allocation2 + $0x16] sm:$0x3]
    %v52 = vld [vmem:[#allocation2 + $0x18] sm:$0x3]
    %v53 = vld [vmem:[#allocation2 + $0x1a] sm:$0x3]
    %v54 = vld [vmem:[#allocation2 + $0x1c] sm:$0x3]
    %v55 = vld [vmem:[#allocation2 + $0x1e] sm:$0x3]
    %v56 = vld [vmem:[#allocation5] sm:$0x1]
    %v57 = vld [vmem:[#allocation5 + $0x1] sm:$0x1]
    %v58 = vld [vmem:[#allocation5 + $0x2] sm:$0x1]
    %v59 = vld [vmem:[#allocation5 + $0x3] sm:$0x1]
    %v60 = vld [vmem:[#allocation5 + $0x4] sm:$0x1]
    %v61 = vld [vmem:[#allocation5 + $0x5] sm:$0x1]
    %v62 = vld [vmem:[#allocation5 + $0x6] sm:$0x1]
    %v63 = vld [vmem:[#allocation5 + $0x7] sm:$0x1]
    %v64 = vld [vmem:[#allocation5 + $0x8] sm:$0x1]
    %v65 = vld [vmem:[#allocation5 + $0x9] sm:$0x1]
    %v66 = vld [vmem:[#allocation5 + $0xa] sm:$0x1]
    %v67 = vld [vmem:[#allocation5 + $0xb] sm:$0x1]
    %v68 = vld [vmem:[#allocation5 + $0xc] sm:$0x1]
    %v69 = vld [vmem:[#allocation5 + $0xd] sm:$0x1]
    %v70 = vld [vmem:[#allocation5 + $0xe] sm:$0x1]
    %v71 = vld [vmem:[#allocation5 + $0xf] sm:$0x1]
    %v88 = vlaneseq
    %v89 = vshrl.u32 %v88, 7
    %v90 = vsub.s32 0, %v89
    %v91 = vrot.slane %v56, %v90
    %v92 = vlaneseq
    %v93 = vshrl.u32 %v92, 7
    %v94 = vsub.s32 0, %v93
    %v95 = vrot.slane %v57, %v94
    %v96 = vlaneseq
    %v97 = vshrl.u32 %v96, 7
    %v98 = vsub.s32 0, %v97
    %v99 = vrot.slane %v58, %v98
    %v100 = vlaneseq
    %v101 = vshrl.u32 %v100, 7
    %v102 = vsub.s32 0, %v101
    %v103 = vrot.slane %v59, %v102
    %v104 = vlaneseq
    %v105 = vshrl.u32 %v104, 7
    %v106 = vsub.s32 0, %v105
    %v107 = vrot.slane %v60, %v106
    %v108 = vlaneseq
    %v109 = vshrl.u32 %v108, 7
    %v110 = vsub.s32 0, %v109
    %v111 = vrot.slane %v61, %v110
    %v112 = vlaneseq
    %v113 = vshrl.u32 %v112, 7
    %v114 = vsub.s32 0, %v113
    %v115 = vrot.slane %v62, %v114
    %v116 = vlaneseq
    %v117 = vshrl.u32 %v116, 7
    %v118 = vsub.s32 0, %v117
    %v119 = vrot.slane %v63, %v118
    %v120 = vlaneseq
    %v121 = vshrl.u32 %v120, 7
    %v122 = vsub.s32 0, %v121
    %v123 = vrot.slane %v64, %v122
    %v124 = vlaneseq
    %v125 = vshrl.u32 %v124, 7
    %v126 = vsub.s32 0, %v125
    %v127 = vrot.slane %v65, %v126
    %v128 = vlaneseq
    %v129 = vshrl.u32 %v128, 7
    %v130 = vsub.s32 0, %v129
    %v131 = vrot.slane %v66, %v130
    %v132 = vlaneseq
    %v133 = vshrl.u32 %v132, 7
    %v134 = vsub.s32 0, %v133
    %v135 = vrot.slane %v67, %v134
    %v136 = vlaneseq
    %v137 = vshrl.u32 %v136, 7
    %v138 = vsub.s32 0, %v137
    %v139 = vrot.slane %v68, %v138
    %v140 = vlaneseq
    %v141 = vshrl.u32 %v140, 7
    %v142 = vsub.s32 0, %v141
    %v143 = vrot.slane %v69, %v142
    %v144 = vlaneseq
    %v145 = vshrl.u32 %v144, 7
    %v146 = vsub.s32 0, %v145
    %v147 = vrot.slane %v70, %v146
    %v148 = vlaneseq
    %v149 = vshrl.u32 %v148, 7
    %v150 = vsub.s32 0, %v149
    %v151 = vrot.slane %v71, %v150
    %v168 = vadd.f32 %v40, %v91
    %v169 = vadd.f32 %v41, %v95
    %v170 = vadd.f32 %v42, %v99
    %v171 = vadd.f32 %v43, %v103
    %v172 = vadd.f32 %v44, %v107
    %v173 = vadd.f32 %v45, %v111
    %v174 = vadd.f32 %v46, %v115
    %v175 = vadd.f32 %v47, %v119
    %v176 = vadd.f32 %v48, %v123
    %v177 = vadd.f32 %v49, %v127
    %v178 = vadd.f32 %v50, %v131
    %v179 = vadd.f32 %v51, %v135
    %v180 = vadd.f32 %v52, %v139
    %v181 = vadd.f32 %v53, %v143
    %v182 = vadd.f32 %v54, %v147
    %v183 = vadd.f32 %v55, %v151
    %184 = vst [vmem:[#allocation7] sm:$0x3] %v168
    %185 = vst [vmem:[#allocation7 + $0x2] sm:$0x3] %v169
    %186 = vst [vmem:[#allocation7 + $0x4] sm:$0x3] %v170
    %187 = vst [vmem:[#allocation7 + $0x6] sm:$0x3] %v171
    %188 = vst [vmem:[#allocation7 + $0x8] sm:$0x3] %v172
    %189 = vst [vmem:[#allocation7 + $0xa] sm:$0x3] %v173
    %190 = vst [vmem:[#allocation7 + $0xc] sm:$0x3] %v174
    %191 = vst [vmem:[#allocation7 + $0xe] sm:$0x3] %v175
    %192 = vst [vmem:[#allocation7 + $0x10] sm:$0x3] %v176
    %193 = vst [vmem:[#allocation7 + $0x12] sm:$0x3] %v177
    %194 = vst [vmem:[#allocation7 + $0x14] sm:$0x3] %v178
    %195 = vst [vmem:[#allocation7 + $0x16] sm:$0x3] %v179
    %196 = vst [vmem:[#allocation7 + $0x18] sm:$0x3] %v180
    %197 = vst [vmem:[#allocation7 + $0x1a] sm:$0x3] %v181
    %198 = vst [vmem:[#allocation7 + $0x1c] sm:$0x3] %v182
    %199 = vst [vmem:[#allocation7 + $0x1e] sm:$0x3] %v183
    // Predicated region
    $region18: #{tpu_custom_call.1} parent=1 // pred_check
      _
    $region19: #{tpu_custom_call.1} parent=1 // pred_check_branch
      %201 = sbr.rel (0) target = $region21
    $region20: #{tpu_custom_call.1} parent=1 // pred_region
      %s203 = ssub.s32 512, 512
      %204 = vsyncadd [#allocation4], %s203
      %s205 = sshll.u32 [#allocation7], 4
      %s206 = int_to_ptr.vmem [resolvable:$true] %s205
      %211 = dma.vmem_to_hbm [thread:$0]  %s206, 512, %s2, [#allocation4], 32, 32, 2
    $region21: #{tpu_custom_call.1} parent=1 // pred_fallthru
      _
    // Predicated region
    $region22: #{tpu_custom_call.1} parent=1 // pred_check
      _
    $region23: #{tpu_custom_call.1} parent=1 // pred_check_branch
      %213 = sbr.rel (0) target = $region25
    $region24: #{tpu_custom_call.1} parent=1 // pred_region
      %214 = dma.done [#allocation4], 512
    $region25: #{tpu_custom_call.1} parent=1 // pred_fallthru
      _
    %215 = vsyncpa [#allocation3], 1
    %216 = vsyncpa [#allocation6], 1
    %217 = vsyncpa [#allocation4], 1

</llo_original>
